<compile_context>
chip_gen: v5e
topology: v5e:2x2
jax: 0.10.0
libtpu: 0.0.40
codegen_flags: <defaults>
</compile_context>

<pallas_src>
import math

import jax
import jax.numpy as jnp
from jax.experimental import pallas as pl
from jax.experimental.pallas import tpu as pltpu


def _sinusoidal_kernel(time_ref, freqs_ref, phase_ref, out_ref):
    """out[r, c*dim + j] = sin(time[r, c] * freqs_full[j] + phase[j]).

    time_ref : (TBR, k)     f32  -- k batch rows folded into one kernel row
    freqs_ref: (1, dim)     f32  -- [f, f]      (freqs repeated for sin|cos halves)
    phase_ref: (1, dim)     f32  -- [0.., pi/2..]  so cos(x) == sin(x + pi/2)
    out_ref  : (TBR, k*dim) f32  -- lane-dense packed output
    """
    k = time_ref.shape[1]
    # Per-chunk VPU broadcast multiply-add (exact f32, no MXU), then a single
    # lane-concat so the expensive sin polynomial and the single store both run
    # on full 128-lane-dense vregs.
    pieces = [
        time_ref[:, c:c + 1] * freqs_ref[...] + phase_ref[...] for c in range(k)
    ]
    emb = pieces[0] if k == 1 else jnp.concatenate(pieces, axis=-1)
    out_ref[...] = jnp.sin(emb)


def _round_up(x: int, m: int) -> int:
    return (x + m - 1) // m * m


_MIN_SPLIT_ROWS = 256          # don't bother splitting tiny batches across TCs
_MAX_OUT_TILE_BYTES = 4 << 20  # per output buffer (x2 double-buffered = 8 MiB)


def sinusoidal_position_embeddings(
    time: jax.Array, dim: int, *, max_block_rows: int = 2048
) -> jax.Array:
    """Pallas equivalent of SinusoidalPositionEmbeddings(dim)(time) for 1-D time."""
    assert time.ndim == 1, "time must be shape (B,)"
    assert dim % 2 == 0, "dim must be even"
    half_dim = dim // 2
    assert half_dim >= 2, "dim must be >= 4 (scale divides by half_dim - 1)"

    b = time.shape[0]

    # Lane-dense packing factor: fold k = 128 // dim batch rows per kernel row
    # (only when dim divides 128 and b divides evenly, so the final reshape
    # stays a free row-major view).
    if dim < 128 and 128 % dim == 0 and b % (128 // dim) == 0:
        k = 128 // dim
    else:
        k = 1
    row_dim = k * dim
    rows = b // k
    rows_pad8 = _round_up(rows, 8)

    # Row tile: as large as possible (amortize ~0.35us per grid step), but
    #  - split >= 2 ways when there is enough work so the "parallel" grid axis
    #    actually shards across both v7x TensorCores,
    #  - keep the double-buffered (tbr, row_dim) f32 output tile well under the
    #    scoped-VMEM default on every generation (v5e 16 MiB / v6e-v7x 32 MiB).
    tbr = min(max_block_rows, rows_pad8)
    if rows_pad8 >= 2 * _MIN_SPLIT_ROWS:
        tbr = min(tbr, _round_up(pl.cdiv(rows_pad8, 2), 8))
    vmem_rows = max(8, (_MAX_OUT_TILE_BYTES // (row_dim * 4)) // 8 * 8)
    tbr = max(8, min(tbr, vmem_rows))
    grid_rows = pl.cdiv(rows_pad8, tbr)
    rows_alloc = grid_rows * tbr  # pad the (tiny) input so reads never go OOB

    time_rows = time.astype(jnp.float32).reshape(rows, k)
    if rows_alloc != rows:
        time_rows = jnp.pad(time_rows, ((0, rows_alloc - rows), (0, 0)))

    # Hoisted transcendental + sin/cos fusion constants (computed once,
    # identical to the PyTorch module's exp(arange(half_dim) * -scale)).
    scale = math.log(10000.0) / (half_dim - 1)
    freqs = jnp.exp(jnp.arange(half_dim, dtype=jnp.float32) * (-scale))
    freqs_full = jnp.concatenate([freqs, freqs]).reshape(1, dim)
    phase = jnp.concatenate(
        [jnp.zeros((half_dim,), jnp.float32),
         jnp.full((half_dim,), jnp.pi / 2, dtype=jnp.float32)]
    ).reshape(1, dim)

    out = pl.pallas_call(
        _sinusoidal_kernel,
        out_shape=jax.ShapeDtypeStruct((rows_pad8, row_dim), jnp.float32),
        grid_spec=pltpu.PrefetchScalarGridSpec(
            num_scalar_prefetch=0,
            grid=(grid_rows,),
            in_specs=[
                pl.BlockSpec((tbr, k), lambda i: (i, 0)),    # packed time tile
                pl.BlockSpec((1, dim), lambda i: (0, 0)),    # freqs, resident
                pl.BlockSpec((1, dim), lambda i: (0, 0)),    # phase, resident
            ],
            out_specs=pl.BlockSpec((tbr, row_dim), lambda i: (i, 0)),
        ),
        compiler_params=pltpu.CompilerParams(
            dimension_semantics=("parallel",),
        ),
    )(time_rows, freqs_full, phase)

    # Free row-major un-pack: (rows, k*dim) -> (rows*k, dim).
    out = out.reshape(rows_pad8 * k, dim)
    return out[:b] if rows_pad8 * k != b else out


def _reference(time: jax.Array, dim: int) -> jax.Array:
    """Pure-JAX reference mirroring the PyTorch forward exactly."""
    half_dim = dim // 2
    scale = math.log(10000.0) / (half_dim - 1)
    freqs = jnp.exp(jnp.arange(half_dim, dtype=jnp.float32) * -scale)
    emb = time.astype(jnp.float32)[:, None] * freqs[None, :]
    return jnp.concatenate([jnp.sin(emb), jnp.cos(emb)], axis=-1)


if __name__ == "__main__":
    key = jax.random.PRNGKey(0)
    batch = 16
    dim = 64  # module's `dim` hyperparameter

    # Diffusion-style integer timesteps, cast to float.  Moderate range so the
    # tolerance comfortably covers transcendental-implementation differences
    # (including the cos(x) = sin(x + pi/2) fusion) vs the XLA reference path.
    time = jax.random.randint(key, (batch,), 0, 100).astype(jnp.float32)

    out = jax.block_until_ready(sinusoidal_position_embeddings(time, dim))
    ref = _reference(time, dim)

    assert out.shape == (batch, dim)
    assert out.dtype == jnp.float32
    max_err = float(jnp.max(jnp.abs(out - ref)))
    assert max_err < 2e-3, f"mismatch vs reference, max abs err={max_err:.3e}"

    print("KERNEL_OK")
</pallas_src>

<mosaic_0001>
module attributes {stable_mosaic.version = 11 : i64} {
  func.func @_sinusoidal_kernel(%arg0: i32, %arg1: memref<8x2xf32, #tpu.memory_space<vmem>>, %arg2: memref<1x64xf32, #tpu.memory_space<vmem>>, %arg3: memref<1x64xf32, #tpu.memory_space<vmem>>, %arg4: memref<8x128xf32, #tpu.memory_space<vmem>>) attributes {dimension_semantics = [#tpu.dimension_semantics<parallel>], iteration_bounds = array<i64: 1>, scalar_prefetch = 0 : i64, scratch_operands = 0 : i64, tpu.core_type = #tpu.core_type<tc>, window_params = [{transform_indices = @transform_0, window_bounds = array<i64: 8, 2>}, {pipeline_mode = #tpu.pipeline_mode<synchronous>, transform_indices = @transform_1, window_bounds = array<i64: 1, 64>}, {pipeline_mode = #tpu.pipeline_mode<synchronous>, transform_indices = @transform_2, window_bounds = array<i64: 1, 64>}, {transform_indices = @transform_3, window_bounds = array<i64: 8, 128>}]} {
    %c0 = arith.constant 0 : index
    %c0_0 = arith.constant 0 : index
    %0 = vector.load %arg1[%c0, %c0_0] : memref<8x2xf32, #tpu.memory_space<vmem>>, vector<8x1xf32>
    %c0_1 = arith.constant 0 : index
    %c0_2 = arith.constant 0 : index
    %1 = vector.load %arg2[%c0_1, %c0_2] : memref<1x64xf32, #tpu.memory_space<vmem>>, vector<1x64xf32>
    %2 = vector.broadcast %0 : vector<8x1xf32> to vector<8x64xf32>
    %3 = vector.broadcast %1 : vector<1x64xf32> to vector<8x64xf32>
    %4 = arith.mulf %2, %3 : vector<8x64xf32>
    %c0_3 = arith.constant 0 : index
    %c0_4 = arith.constant 0 : index
    %5 = vector.load %arg3[%c0_3, %c0_4] : memref<1x64xf32, #tpu.memory_space<vmem>>, vector<1x64xf32>
    %6 = vector.broadcast %5 : vector<1x64xf32> to vector<8x64xf32>
    %7 = arith.addf %4, %6 : vector<8x64xf32>
    %c0_5 = arith.constant 0 : index
    %c1 = arith.constant 1 : index
    %8 = vector.load %arg1[%c0_5, %c1] : memref<8x2xf32, #tpu.memory_space<vmem>>, vector<8x1xf32>
    %c0_6 = arith.constant 0 : index
    %c0_7 = arith.constant 0 : index
    %9 = vector.load %arg2[%c0_6, %c0_7] : memref<1x64xf32, #tpu.memory_space<vmem>>, vector<1x64xf32>
    %10 = vector.broadcast %8 : vector<8x1xf32> to vector<8x64xf32>
    %11 = vector.broadcast %9 : vector<1x64xf32> to vector<8x64xf32>
    %12 = arith.mulf %10, %11 : vector<8x64xf32>
    %c0_8 = arith.constant 0 : index
    %c0_9 = arith.constant 0 : index
    %13 = vector.load %arg3[%c0_8, %c0_9] : memref<1x64xf32, #tpu.memory_space<vmem>>, vector<1x64xf32>
    %14 = vector.broadcast %13 : vector<1x64xf32> to vector<8x64xf32>
    %15 = arith.addf %12, %14 : vector<8x64xf32>
    %16 = tpu.concatenate %7, %15 in 1 : vector<8x64xf32>, vector<8x64xf32> -> vector<8x128xf32>
    %17 = math.sin %16 : vector<8x128xf32>
    %c0_10 = arith.constant 0 : index
    %c0_11 = arith.constant 0 : index
    %18 = vector.load %arg4[%c0_10, %c0_11] : memref<8x128xf32, #tpu.memory_space<vmem>>, vector<8x128xf32>
    tpu.vector_store %arg4[%c0_10, %c0_11], %17 {strides = array<i32>} : memref<8x128xf32, #tpu.memory_space<vmem>>, vector<8x128xf32>,
    return
  }
  func.func @transform_0(%arg0: i32) -> (i32, i32) {
    %c0_i32 = arith.constant 0 : i32
    %c0_i32_0 = arith.constant 0 : i32
    return %arg0, %c0_i32 : i32, i32
  }
  func.func @transform_1(%arg0: i32) -> (i32, i32) {
    %c0_i32 = arith.constant 0 : i32
    %c0_i32_0 = arith.constant 0 : i32
    %c0_i32_1 = arith.constant 0 : i32
    return %c0_i32, %c0_i32_0 : i32, i32
  }
  func.func @transform_2(%arg0: i32) -> (i32, i32) {
    %c0_i32 = arith.constant 0 : i32
    %c0_i32_0 = arith.constant 0 : i32
    %c0_i32_1 = arith.constant 0 : i32
    return %c0_i32, %c0_i32_0 : i32, i32
  }
  func.func @transform_3(%arg0: i32) -> (i32, i32) {
    %c0_i32 = arith.constant 0 : i32
    %c0_i32_0 = arith.constant 0 : i32
    return %arg0, %c0_i32 : i32, i32
  }
}

</mosaic_0001>

<llo_original>
// kernel: tpu_custom_call.1
$region0: #{tpu_custom_call.1}
  #allocation0 [shape = 'u32[]', space=smem, size = 0x4, offset = 0x4, fixed_abs, tag = 'smem constant byte address 0x4 - core index']
  #allocation1 [shape = 'u32[72,128]{1,0:T(1,128)}', space=vmem, size = 0x9000, scoped, tag = 'internal scratch']
  %s0 = inlined_call_operand.vmem [shape: f32[8,2], index: 0, kind: input, shape index: {}]
  %s1 = inlined_call_operand.vmem [shape: f32[1,64], index: 1, kind: input, shape index: {}]
  %s2 = inlined_call_operand.vmem [shape: f32[1,64], index: 2, kind: input, shape index: {}]
  %s3 = inlined_call_operand.hbm [shape: f32[8,128], index: 3, kind: output, shape index: {}]
  %s4 = sld [smem:[#allocation0]]
  $region22: #{tpu_custom_call.1} parent=0
    _
  %s6 = ssub.s32 1, %s4
  %s7 = scalar_select 0, %s6, %s4
  $region1: #{tpu_custom_call.1} parent=0
    #allocation2 [shape = 'u8[4096]{0}', space=vmem, size = 0x1000, scoped, tag = 'output window, operand 0, single buffered']
    #allocation3 [shape = 's32[1]{0}', space=sflag, size = 0x4, scoped, tag = 'scoped memory for tpu_custom_call.1']
    %8 = vsyncpa [#allocation3], 0
    // Predicated region
    $region2: #{tpu_custom_call.1} parent=1 // pred_check
      _
    $region3: #{tpu_custom_call.1} parent=1 // pred_check_branch
      %10 = sbr.rel (0) target = $region5
    $region4: #{tpu_custom_call.1} parent=1 // pred_region
      _
    $region5: #{tpu_custom_call.1} parent=1 // pred_fallthru
      _
    // Predicated region
    $region6: #{tpu_custom_call.1} parent=1 // pred_check
      _
    $region7: #{tpu_custom_call.1} parent=1 // pred_check_branch
      %12 = sbr.rel (0) target = $region9
    $region8: #{tpu_custom_call.1} parent=1 // pred_region
      _
    $region9: #{tpu_custom_call.1} parent=1 // pred_fallthru
      _
    // Predicated region
    $region10: #{tpu_custom_call.1} parent=1 // pred_check
      _
    $region11: #{tpu_custom_call.1} parent=1 // pred_check_branch
      %14 = sbr.rel (0) target = $region13
    $region12: #{tpu_custom_call.1} parent=1 // pred_region
      _
    $region13: #{tpu_custom_call.1} parent=1 // pred_fallthru
      _
    %v15 = vld [vmem:[%s0] sm:$0xff]
    %v16 = vld [vmem:[%s1] sm:$0x1]
    %18 = vset.pattern.permute.xlu0 0
    %19 = vperm.xlu0 %18, %v15
    %v20 = vpop.permute.xlu0 %19
    %v23 = vperm.slane %v16, 0
    %v25 = vmul.f32 %v20, %v23
    %v26 = vld [vmem:[%s2] sm:$0x1]
    %v28 = vperm.slane %v26, 0
    %v30 = vadd.f32 %v25, %v28
    %31 = vset.pattern.permute.xlu0 1
    %32 = vperm.xlu0 %31, %v15
    %v33 = vpop.permute.xlu0 %32
    %v35 = vmul.f32 %v33, %v23
    %v36 = vadd.f32 %v35, %v28
    %38 = vrot.lane.b32.xlu0 %v36, 64
    %v39 = vpop.permute.xlu0 %38
    %vm41 = vcmask 523264
    %v42 = vsel %vm41, %v30, %v39
    %v43 = vand.u32 2147483647, %v42
    %vm44 = vcmp.le.f32.partialorder %v43, 0.7853982
    %vm45 = vcmp.lt.s32.totalorder %v42, 0
    %v46 = vand.u32 %v42, 2139095040
    %v47 = vshrl.u32 %v46, 23
    %v48 = vsub.s32 %v47, 127
    %v49 = vand.u32 2147483647, %v42
    %v50 = vand.u32 %v49, 8388607
    %v51 = vor.u32 %v50, 8388608
    %v52 = vsub.s32 0, %v51
    %v53 = vadd.s32 %v48, 1
    %vm54 = vcmp.gt.s32.totalorder %v53, 0
    %v55 = vsel %vm54, %v53, 0
    %v56 = vshrl.u32 %v55, 5
    %v57 = vand.u32 %v55, 31
    %v58 = vsub.s32 32, %v57
    %v59 = vshrl.u32 683565275, %v58
    %v60 = vshll.u32 683565275, %v57
    %v61 = vshrl.u32 2475754826, %v58
    %v62 = vor.u32 %v60, %v61
    %v63 = vshll.u32 2475754826, %v57
    %v64 = vshrl.u32 2131351028, %v58
    %v65 = vor.u32 %v63, %v64
    %v66 = vshll.u32 2131351028, %v57
    %v67 = vshrl.u32 2102212464, %v58
    %v68 = vor.u32 %v66, %v67
    %v69 = vshll.u32 2102212464, %v57
    %v70 = vshrl.u32 920167782, %v58
    %v71 = vor.u32 %v69, %v70
    %v72 = vshll.u32 920167782, %v57
    %v73 = vshrl.u32 1326507024, %v58
    %v74 = vor.u32 %v72, %v73
    %vm75 = vcmp.lt.s32.totalorder %v56, 1
    %vm76 = vcmp.lt.s32.totalorder %v56, 2
    %vm77 = vcmp.lt.s32.totalorder %v56, 3
    %vm78 = vcmp.lt.s32.totalorder %v56, 4
    %v79 = vsel %vm75, %v59, %v62
    %v80 = vsel %vm78, %v68, 2102212464
    %v81 = vsel %vm77, %v65, %v80
    %v82 = vsel %vm76, %v79, %v81
    %v83 = vsel %vm75, %v62, %v65
    %v84 = vsel %vm78, %v71, 920167782
    %v85 = vsel %vm77, %v68, %v84
    %v86 = vsel %vm76, %v83, %v85
    %v87 = vsel %vm75, %v65, %v68
    %v88 = vsel %vm78, %v74, 1326507024
    %v89 = vsel %vm77, %v71, %v88
    %v90 = vsel %vm76, %v87, %v89
    %v91 = vshll.u32 %v51, 8
    %v92 = vand.u32 %v91, 65535
    %v93 = vshrl.u32 %v91, 16
    %v94 = vand.u32 %v90, 65535
    %v95 = vshrl.u32 %v90, 16
    %v96 = vmul.u32 %v92, %v94
    %v97 = vmul.u32 %v92, %v95
    %v98 = vmul.u32 %v93, %v94
    %v99 = vmul.u32 %v93, %v95
    %v100 = vshll.u32 %v97, 16
    %v101 = vshrl.u32 %v97, 16
    %v102 = vshll.u32 %v98, 16
    %v103 = vshrl.u32 %v98, 16
    %vm104 = vc.u32 %v96, %v100
    %v105 = vsel %vm104, 1, 0
    %v106 = vadd.s32 %v96, %v100
    %v107 = vadd.s32 %v99, %v105
    %vm108 = vc.u32 %v106, %v102
    %v109 = vsel %vm108, 1, 0
    %v110 = vadd.s32 %v106, %v102
    %v111 = vadd.s32 %v107, %v109
    %v112 = vadd.s32 %v111, %v101
    %v113 = vadd.s32 %v112, %v103
    %v114 = vand.u32 %v91, 65535
    %v115 = vshrl.u32 %v91, 16
    %v116 = vand.u32 %v86, 65535
    %v117 = vshrl.u32 %v86, 16
    %v118 = vmul.u32 %v114, %v116
    %v119 = vmul.u32 %v114, %v117
    %v120 = vmul.u32 %v115, %v116
    %v121 = vmul.u32 %v115, %v117
    %v122 = vshll.u32 %v119, 16
    %v123 = vshrl.u32 %v119, 16
    %v124 = vshll.u32 %v120, 16
    %v125 = vshrl.u32 %v120, 16
    %vm126 = vc.u32 %v118, %v122
    %v127 = vsel %vm126, 1, 0
    %v128 = vadd.s32 %v118, %v122
    %v129 = vadd.s32 %v121, %v127
    %vm130 = vc.u32 %v128, %v124
    %v131 = vsel %vm130, 1, 0
    %v132 = vadd.s32 %v128, %v124
    %v133 = vadd.s32 %v129, %v131
    %v134 = vadd.s32 %v133, %v123
    %v135 = vadd.s32 %v134, %v125
    %v136 = vmul.u32 %v91, %v82
    %v137 = vadd.s32 %v113, %v132
    %vm138 = vc.u32 %v113, %v132
    %v139 = vadd.s32 %v135, 1
    %v140 = vsel %vm138, %v139, %v135
    %v141 = vadd.s32 %v136, %v140
    %v142 = vadd.s32 %v141, 536870912
    %v143 = vshrl.u32 %v142, 30
    %v144 = vshll.u32 %v143, 30
    %v145 = vsub.s32 %v141, %v144
    %vm146 = vcmp.lt.s32.totalorder %v145, 0
    %v147 = vsub.s32 0, %v145
    %v148 = vsel %vm146, %v147, %v145
    %v149 = vclz %v148
    %v150 = vsub.s32 %v149, 2
    %vm151 = vcmp.gt.s32.totalorder 0, %v150
    %v152 = vsel %vm151, 0, %v150
    %v153 = vsub.s32 32, %v152
    %v154 = vshll.u32 %v145, %v152
    %v155 = vshrl.u32 %v137, %v153
    %v156 = vor.u32 %v154, %v155
    %v157 = vsub.s32 4294967266, %v152
    %v158 = vadd.s32 %v157, 127
    %v159 = vshll.u32 %v158, 23
    %v160 = vor.u32 4788187, %v159
    %v161 = vand.u32 2147483647, %v160
    %v163 = vcvt.s32.f32 %v156
    %v164 = vmul.f32 %v163, %v161
    %v165 = vxor.u32 %v164, 2147483648
    %v166 = vsel %vm45, %v165, %v164
    %v167 = vsub.s32 4, %v143
    %v168 = vsel %vm45, %v167, %v143
    %v169 = vsel %vm44, %v42, %v166
    %v170 = vsel %vm44, 0, %v168
    %v171 = vmul.f32 %v169, %v169
    %v172 = vmul.f32 %v171, -0.001358992
    %v173 = vadd.f32 %v172, 0.041655596
    %v174 = vmul.f32 %v171, %v173
    %v175 = vadd.f32 %v174, -0.4999988
    %v176 = vmul.f32 %v171, %v175
    %v177 = vadd.f32 1.0, %v176
    %v178 = vmul.f32 %v169, %v169
    %v179 = vmul.f32 %v178, -0.00019511016
    %v180 = vadd.f32 %v179, 0.008332121
    %v181 = vmul.f32 %v178, %v180
    %v182 = vadd.f32 %v181, -0.16666654
    %v183 = vmul.f32 %v178, %v182
    %v184 = vadd.f32 %v183, 1.0
    %v185 = vmul.f32 %v184, %v169
    %vm186 = vweird.f32 %v42
    %v187 = vadd.s32 %v170, 3
    %v188 = vand.u32 %v187, 3
    %vm189 = vcmp.lt.s32.totalorder %v188, 2
    %vm190 = vcmp.eq.s32.totalorder %v188, 0
    %v191 = vxor.u32 %v185, 2147483648
    %v192 = vsel %vm190, %v177, %v191
    %vm193 = vcmp.eq.s32.totalorder %v188, 2
    %v194 = vxor.u32 %v177, 2147483648
    %v195 = vsel %vm193, %v194, %v185
    %v196 = vsel %vm189, %v192, %v195
    %v197 = vsel %vm186, nan, %v196
    %198 = vst [vmem:[#allocation2] sm:$0xff] %v197
    // Predicated region
    $region14: #{tpu_custom_call.1} parent=1 // pred_check
      _
    $region15: #{tpu_custom_call.1} parent=1 // pred_check_branch
      %200 = sbr.rel (0) target = $region17
    $region16: #{tpu_custom_call.1} parent=1 // pred_region
      %202 = vsyncadd [#allocation3], 0
      %s204 = sshll.u32 [#allocation2], 4
      %s205 = int_to_ptr.vmem [resolvable:$true] %s204
      %s206 = sshll.u32 %s3, 4
      %s207 = int_to_ptr.hbm [resolvable:$true] %s206
      %209 = dma.vmem_to_hbm [thread:$0]  %s205, 128, %s207, [#allocation3]
    $region17: #{tpu_custom_call.1} parent=1 // pred_fallthru
      _
    // Predicated region
    $region18: #{tpu_custom_call.1} parent=1 // pred_check
      _
    $region19: #{tpu_custom_call.1} parent=1 // pred_check_branch
      %211 = sbr.rel (0) target = $region21
    $region20: #{tpu_custom_call.1} parent=1 // pred_region
      %213 = dma.done [#allocation3], 128
    $region21: #{tpu_custom_call.1} parent=1 // pred_fallthru
      _
    %214 = vsyncpa [#allocation3], 1

</llo_original>
